<compile_context>
chip_gen: v5e
topology: v5e:2x2
jax: 0.10.0
libtpu: 0.0.40
codegen_flags: <defaults>
</compile_context>

<pallas_src>
import jax
import jax.numpy as jnp
from jax import lax
from jax.experimental import pallas as pl
from jax.experimental.pallas import tpu as pltpu

_EPS = 1e-5  # PyTorch nn.LayerNorm default


def _layernorm(x, gamma, beta):
    mu = jnp.mean(x, axis=-1, keepdims=True)
    var = jnp.mean((x - mu) ** 2, axis=-1, keepdims=True)  # biased, like PyTorch
    return (x - mu) * lax.rsqrt(var + _EPS) * gamma + beta


def _gelu(x):
    # nn.GELU() default = exact erf-based GELU (kept for PyTorch-matching numerics)
    return 0.5 * x * (1.0 + lax.erf(x * jnp.float32(0.7071067811865476)))


def _num_tensorcores():
    """Best-effort TensorCore count addressable by one pallas_call.

    v5e/v6e -> 1 (grid fully collapsed), v7x -> 2 (one parallel grid step per
    core).  Falls back to 1 (fully collapsed grid) if the query is unavailable.
    """
    try:
        info = pltpu.get_tpu_info()
        for name in ("num_tensorcores", "tensorcores_per_chip",
                     "num_cores", "cores_per_chip", "core_count"):
            n = getattr(info, name, None)
            if isinstance(n, int) and 1 <= n <= 16:
                return n
    except Exception:
        pass
    return 1


def mixer_mlp_kernel(x_ref,
                     s_g_ref, s_b_ref, s_w1_ref, s_b1_ref, s_w2_ref, s_b2_ref,
                     f_g_ref, f_b_ref, f_w1_ref, f_b1_ref, wc_ref, bc_ref,
                     o_ref):
    # Parameter tiles are tiny; load once and reuse for every batch row.
    s_g, s_b = s_g_ref[...], s_b_ref[...]          # (1, H)  f32
    s_w1, s_b1 = s_w1_ref[...], s_b1_ref[...]      # (S, L) bf16, (S, 1) f32
    s_w2, s_b2 = s_w2_ref[...], s_b2_ref[...]      # (L, S) bf16, (L, 1) f32
    f_g, f_b = f_g_ref[...], f_b_ref[...]          # (1, H)  f32
    f_w1, f_b1 = f_w1_ref[...], f_b1_ref[...]      # (H, hF) bf16, (1, hF) f32
    wc, bc = wc_ref[...], bc_ref[...]              # (hF, H) bf16, (1, H)  f32

    tb = x_ref.shape[0]
    for b in range(tb):                            # static, tiny (batch rows per step)
        x = x_ref[b]                               # (L, H) f32

        # ---------- scb (token-mixing); weights on the left -> no transposes ----------
        y = _layernorm(x, s_g, s_b).astype(jnp.bfloat16)                      # (L, H)
        h = _gelu(jnp.dot(s_w1, y, preferred_element_type=jnp.float32)
                  + s_b1)                                                     # (S, H) f32
        s = jnp.dot(s_w2, h.astype(jnp.bfloat16),
                    preferred_element_type=jnp.float32) + s_b2                # (L, H) f32
        x1 = x + s                                                            # residual

        # ---------- fcb (channel-mixing, block-diagonal heads, fused tail) ----------
        z = _layernorm(x1, f_g, f_b).astype(jnp.bfloat16)                     # (L, H)
        h2 = _gelu(jnp.dot(z, f_w1, preferred_element_type=jnp.float32)
                   + f_b1)                                                    # (L, heads*F)
        fused = jnp.dot(h2.astype(jnp.bfloat16), wc,
                        preferred_element_type=jnp.float32) + bc              # (L, H)

        o_ref[b] = (x1 + fused).astype(o_ref.dtype)


def mixer_mlp(x, packed, *, batch_block=None):
    """x: (B, L, H) float32. packed: parameter arrays in kernel order."""
    B, L, H = x.shape

    if batch_block is None:
        n_steps = max(1, min(_num_tensorcores(), B))
        if B % n_steps != 0:
            n_steps = 1
        batch_block = B // n_steps
    n_steps = B // batch_block

    def full_spec(arr):
        nd = arr.ndim
        return pl.BlockSpec(arr.shape, lambda i, nd=nd: (0,) * nd)

    in_specs = [pl.BlockSpec((batch_block, L, H), lambda i: (i, 0, 0))]
    in_specs += [full_spec(p) for p in packed]
    out_spec = pl.BlockSpec((batch_block, L, H), lambda i: (i, 0, 0))

    return pl.pallas_call(
        mixer_mlp_kernel,
        out_shape=jax.ShapeDtypeStruct((B, L, H), x.dtype),
        grid=(n_steps,),
        in_specs=in_specs,
        out_specs=out_spec,
        compiler_params=pltpu.CompilerParams(
            dimension_semantics=("parallel",)),
    )(x, *packed)


def init_params(key, L, H, S, F, heads):
    """Deterministic parameter init mirroring the PyTorch module shapes."""
    d = H // heads
    ks = jax.random.split(key, 6 + 2 * heads + 1)

    def linear(k, out_dim, in_dim):
        kw, kb = jax.random.split(k)
        bound = 1.0 / jnp.sqrt(jnp.float32(in_dim))
        w = jax.random.uniform(kw, (out_dim, in_dim), jnp.float32, -bound, bound)
        b = jax.random.uniform(kb, (out_dim,), jnp.float32, -bound, bound)
        return w, b

    # scb FeedForward: Linear(L -> S), Linear(S -> L)
    s_w1, s_b1 = linear(ks[0], S, L)
    s_w2, s_b2 = linear(ks[1], L, S)
    # LayerNorm affine params (random so the test is non-trivial)
    s_g = 1.0 + 0.1 * jax.random.normal(ks[2], (H,), jnp.float32)
    s_b = 0.1 * jax.random.normal(ks[3], (H,), jnp.float32)
    f_g = 1.0 + 0.1 * jax.random.normal(ks[4], (H,), jnp.float32)
    f_b = 0.1 * jax.random.normal(ks[5], (H,), jnp.float32)
    # per-head fcb FeedForwards: Linear(d -> F), Linear(F -> d)
    w1s, b1s, w2s, b2s = [], [], [], []
    for h in range(heads):
        w1, b1 = linear(ks[6 + h], F, d)
        w2, b2 = linear(ks[6 + heads + h], d, F)
        w1s.append(w1); b1s.append(b1); w2s.append(w2); b2s.append(b2)
    fuse_w, fuse_b = linear(ks[6 + 2 * heads], H, H)

    # ---- block-diagonal packing of per-head weights (plain-JAX glue) ----
    f_w1 = jnp.zeros((H, heads * F), jnp.float32)
    f_w2 = jnp.zeros((heads * F, H), jnp.float32)
    for h in range(heads):
        f_w1 = f_w1.at[h * d:(h + 1) * d, h * F:(h + 1) * F].set(w1s[h].T)
        f_w2 = f_w2.at[h * F:(h + 1) * F, h * d:(h + 1) * d].set(w2s[h].T)
    f_b1 = jnp.concatenate(b1s, axis=0)          # (heads*F,)
    f_b2 = jnp.concatenate(b2s, axis=0)          # (H,)

    # ---- algebraic fusion of the second fcb linear with the fuse head ----
    # (h2 @ f_w2 + f_b2) @ fuse_w.T + fuse_b == h2 @ W_comb + b_comb  (eval mode)
    w_comb = f_w2 @ fuse_w.T                     # (heads*F, H) f32
    b_comb = f_b2 @ fuse_w.T + fuse_b            # (H,)         f32

    bf16 = jnp.bfloat16
    packed = [
        s_g.reshape(1, H), s_b.reshape(1, H),
        s_w1.astype(bf16), s_b1.reshape(S, 1),       # (S, L), (S, 1)
        s_w2.astype(bf16), s_b2.reshape(L, 1),       # (L, S), (L, 1)
        f_g.reshape(1, H), f_b.reshape(1, H),
        f_w1.astype(bf16), f_b1.reshape(1, heads * F),
        w_comb.astype(bf16), b_comb.reshape(1, H),
    ]
    raw = dict(s_w1=s_w1, s_b1=s_b1, s_w2=s_w2, s_b2=s_b2,
               s_g=s_g, s_b=s_b, f_g=f_g, f_b=f_b,
               w1s=w1s, b1s=b1s, w2s=w2s, b2s=b2s,
               fuse_w=fuse_w, fuse_b=fuse_b, heads=heads, d=d)
    return packed, raw


def reference(x, raw):
    """Pure-JAX f32 replica of the PyTorch forward (eval mode), per-head loop."""
    s_g, s_b, f_g, f_b = raw["s_g"], raw["s_b"], raw["f_g"], raw["f_b"]
    heads, d = raw["heads"], raw["d"]

    # scb
    y = _layernorm(x, s_g, s_b)
    y = jnp.swapaxes(y, 1, 2)                                     # (B, H, L)
    y = _gelu(y @ raw["s_w1"].T + raw["s_b1"]) @ raw["s_w2"].T + raw["s_b2"]
    x1 = x + jnp.swapaxes(y, 1, 2)

    # fcb
    z = _layernorm(x1, f_g, f_b)
    outs = []
    for h in range(heads):
        zh = z[..., h * d:(h + 1) * d]
        oh = _gelu(zh @ raw["w1s"][h].T + raw["b1s"][h]) @ raw["w2s"][h].T + raw["b2s"][h]
        outs.append(oh)
    cat = jnp.concatenate(outs, axis=-1)
    return x1 + cat @ raw["fuse_w"].T + raw["fuse_b"]


def reference_kernel_math(x, packed):
    """Plain-JAX replica of the exact kernel math (bf16 matmul operands,
    fused fcb tail) — used for a tight implementation check."""
    (s_g, s_b, s_w1, s_b1, s_w2, s_b2,
     f_g, f_b, f_w1, f_b1, wc, bc) = packed

    def one(xb):                                                  # (L, H) f32
        y = _layernorm(xb, s_g, s_b).astype(jnp.bfloat16)
        h = _gelu(jnp.dot(s_w1, y, preferred_element_type=jnp.float32) + s_b1)
        s = jnp.dot(s_w2, h.astype(jnp.bfloat16),
                    preferred_element_type=jnp.float32) + s_b2
        x1 = xb + s
        z = _layernorm(x1, f_g, f_b).astype(jnp.bfloat16)
        h2 = _gelu(jnp.dot(z, f_w1, preferred_element_type=jnp.float32) + f_b1)
        fused = jnp.dot(h2.astype(jnp.bfloat16), wc,
                        preferred_element_type=jnp.float32) + bc
        return x1 + fused

    return jax.vmap(one)(x)


if __name__ == "__main__":
    # Module hyper-params: L=8, hidden_units=32, scb_hidden_units=16,
    # fcb_hidden_units=16, dropout_rate=0.2 (inactive in eval), head_nums=4.
    B, L, H, S, F, heads = 2, 8, 32, 16, 16, 4

    key = jax.random.PRNGKey(0)
    k_x, k_p = jax.random.split(key)
    x = jax.random.normal(k_x, (B, L, H), jnp.float32)
    packed, raw = init_params(k_p, L, H, S, F, heads)

    out = jax.block_until_ready(mixer_mlp(x, packed))
    assert out.shape == (B, L, H)

    # (1) Implementation check: identical math in plain JAX -> tight tolerance.
    ref_impl = reference_kernel_math(x, packed)
    err_impl = float(jnp.max(jnp.abs(out - ref_impl)))
    assert err_impl < 1e-2, f"kernel vs matched-JAX reference: max abs err {err_impl}"

    # (2) Module-semantics check: exact f32 per-head PyTorch-equivalent forward.
    #     Relaxed tolerance because bf16 matmul operands are a deliberate change.
    ref_exact = reference(x, raw)
    err_model = float(jnp.max(jnp.abs(out - ref_exact)))
    assert err_model < 5e-2, f"kernel vs f32 module reference: max abs err {err_model}"

    print("KERNEL_OK")
</pallas_src>

<mosaic_0001>
module attributes {stable_mosaic.version = 11 : i64} {
  func.func @mixer_mlp_kernel(%arg0: i32, %arg1: memref<2x8x32xf32, #tpu.memory_space<vmem>>, %arg2: memref<1x32xf32, #tpu.memory_space<vmem>>, %arg3: memref<1x32xf32, #tpu.memory_space<vmem>>, %arg4: memref<16x8xbf16, #tpu.memory_space<vmem>>, %arg5: memref<16x1xf32, #tpu.memory_space<vmem>>, %arg6: memref<8x16xbf16, #tpu.memory_space<vmem>>, %arg7: memref<8x1xf32, #tpu.memory_space<vmem>>, %arg8: memref<1x32xf32, #tpu.memory_space<vmem>>, %arg9: memref<1x32xf32, #tpu.memory_space<vmem>>, %arg10: memref<32x64xbf16, #tpu.memory_space<vmem>>, %arg11: memref<1x64xf32, #tpu.memory_space<vmem>>, %arg12: memref<64x32xbf16, #tpu.memory_space<vmem>>, %arg13: memref<1x32xf32, #tpu.memory_space<vmem>>, %arg14: memref<2x8x32xf32, #tpu.memory_space<vmem>>) attributes {dimension_semantics = [#tpu.dimension_semantics<parallel>], iteration_bounds = array<i64: 1>, scalar_prefetch = 0 : i64, scratch_operands = 0 : i64, tpu.core_type = #tpu.core_type<tc>, window_params = [{transform_indices = @transform_0, window_bounds = array<i64: 2, 8, 32>}, {pipeline_mode = #tpu.pipeline_mode<synchronous>, transform_indices = @transform_1, window_bounds = array<i64: 1, 32>}, {pipeline_mode = #tpu.pipeline_mode<synchronous>, transform_indices = @transform_2, window_bounds = array<i64: 1, 32>}, {pipeline_mode = #tpu.pipeline_mode<synchronous>, transform_indices = @transform_3, window_bounds = array<i64: 16, 8>}, {pipeline_mode = #tpu.pipeline_mode<synchronous>, transform_indices = @transform_4, window_bounds = array<i64: 16, 1>}, {pipeline_mode = #tpu.pipeline_mode<synchronous>, transform_indices = @transform_5, window_bounds = array<i64: 8, 16>}, {pipeline_mode = #tpu.pipeline_mode<synchronous>, transform_indices = @transform_6, window_bounds = array<i64: 8, 1>}, {pipeline_mode = #tpu.pipeline_mode<synchronous>, transform_indices = @transform_7, window_bounds = array<i64: 1, 32>}, {pipeline_mode = #tpu.pipeline_mode<synchronous>, transform_indices = @transform_8, window_bounds = array<i64: 1, 32>}, {pipeline_mode = #tpu.pipeline_mode<synchronous>, transform_indices = @transform_9, window_bounds = array<i64: 32, 64>}, {pipeline_mode = #tpu.pipeline_mode<synchronous>, transform_indices = @transform_10, window_bounds = array<i64: 1, 64>}, {pipeline_mode = #tpu.pipeline_mode<synchronous>, transform_indices = @transform_11, window_bounds = array<i64: 64, 32>}, {pipeline_mode = #tpu.pipeline_mode<synchronous>, transform_indices = @transform_12, window_bounds = array<i64: 1, 32>}, {transform_indices = @transform_13, window_bounds = array<i64: 2, 8, 32>}]} {
    %c0 = arith.constant 0 : index
    %c0_0 = arith.constant 0 : index
    %0 = vector.load %arg2[%c0, %c0_0] : memref<1x32xf32, #tpu.memory_space<vmem>>, vector<1x32xf32>
    %c0_1 = arith.constant 0 : index
    %c0_2 = arith.constant 0 : index
    %1 = vector.load %arg3[%c0_1, %c0_2] : memref<1x32xf32, #tpu.memory_space<vmem>>, vector<1x32xf32>
    %c0_3 = arith.constant 0 : index
    %c0_4 = arith.constant 0 : index
    %2 = vector.load %arg4[%c0_3, %c0_4] : memref<16x8xbf16, #tpu.memory_space<vmem>>, vector<16x8xbf16>
    %c0_5 = arith.constant 0 : index
    %c0_6 = arith.constant 0 : index
    %3 = vector.load %arg5[%c0_5, %c0_6] : memref<16x1xf32, #tpu.memory_space<vmem>>, vector<16x1xf32>
    %c0_7 = arith.constant 0 : index
    %c0_8 = arith.constant 0 : index
    %4 = vector.load %arg6[%c0_7, %c0_8] : memref<8x16xbf16, #tpu.memory_space<vmem>>, vector<8x16xbf16>
    %c0_9 = arith.constant 0 : index
    %c0_10 = arith.constant 0 : index
    %5 = vector.load %arg7[%c0_9, %c0_10] : memref<8x1xf32, #tpu.memory_space<vmem>>, vector<8x1xf32>
    %c0_11 = arith.constant 0 : index
    %c0_12 = arith.constant 0 : index
    %6 = vector.load %arg8[%c0_11, %c0_12] : memref<1x32xf32, #tpu.memory_space<vmem>>, vector<1x32xf32>
    %c0_13 = arith.constant 0 : index
    %c0_14 = arith.constant 0 : index
    %7 = vector.load %arg9[%c0_13, %c0_14] : memref<1x32xf32, #tpu.memory_space<vmem>>, vector<1x32xf32>
    %c0_15 = arith.constant 0 : index
    %c0_16 = arith.constant 0 : index
    %8 = vector.load %arg10[%c0_15, %c0_16] : memref<32x64xbf16, #tpu.memory_space<vmem>>, vector<32x64xbf16>
    %c0_17 = arith.constant 0 : index
    %c0_18 = arith.constant 0 : index
    %9 = vector.load %arg11[%c0_17, %c0_18] : memref<1x64xf32, #tpu.memory_space<vmem>>, vector<1x64xf32>
    %c0_19 = arith.constant 0 : index
    %c0_20 = arith.constant 0 : index
    %10 = vector.load %arg12[%c0_19, %c0_20] : memref<64x32xbf16, #tpu.memory_space<vmem>>, vector<64x32xbf16>
    %c0_21 = arith.constant 0 : index
    %c0_22 = arith.constant 0 : index
    %11 = vector.load %arg13[%c0_21, %c0_22] : memref<1x32xf32, #tpu.memory_space<vmem>>, vector<1x32xf32>
    %c0_23 = arith.constant 0 : index
    %c0_24 = arith.constant 0 : index
    %c0_25 = arith.constant 0 : index
    %12 = vector.load %arg1[%c0_23, %c0_24, %c0_25] : memref<2x8x32xf32, #tpu.memory_space<vmem>>, vector<1x8x32xf32>
    %13 = vector.shape_cast %12 : vector<1x8x32xf32> to vector<8x32xf32>
    %cst = arith.constant dense<0.000000e+00> : vector<8xf32>
    %14 = vector.multi_reduction <add>, %13, %cst [1] : vector<8x32xf32> to vector<8xf32>
    %15 = vector.shape_cast %14 : vector<8xf32> to vector<8x1xf32>
    %cst_26 = arith.constant 3.200000e+01 : f32
    %16 = vector.broadcast %cst_26 : f32 to vector<8x1xf32>
    %17 = arith.divf %15, %16 : vector<8x1xf32>
    %18 = vector.broadcast %17 : vector<8x1xf32> to vector<8x32xf32>
    %19 = arith.subf %13, %18 : vector<8x32xf32>
    %20 = arith.mulf %19, %19 : vector<8x32xf32>
    %cst_27 = arith.constant dense<0.000000e+00> : vector<8xf32>
    %21 = vector.multi_reduction <add>, %20, %cst_27 [1] : vector<8x32xf32> to vector<8xf32>
    %22 = vector.shape_cast %21 : vector<8xf32> to vector<8x1xf32>
    %cst_28 = arith.constant 3.200000e+01 : f32
    %23 = vector.broadcast %cst_28 : f32 to vector<8x1xf32>
    %24 = arith.divf %22, %23 : vector<8x1xf32>
    %25 = vector.broadcast %17 : vector<8x1xf32> to vector<8x32xf32>
    %26 = arith.subf %13, %25 : vector<8x32xf32>
    %cst_29 = arith.constant 9.99999974E-6 : f32
    %27 = vector.broadcast %cst_29 : f32 to vector<8x1xf32>
    %28 = arith.addf %24, %27 : vector<8x1xf32>
    %29 = math.rsqrt %28 : vector<8x1xf32>
    %30 = vector.broadcast %29 : vector<8x1xf32> to vector<8x32xf32>
    %31 = arith.mulf %26, %30 : vector<8x32xf32>
    %32 = vector.broadcast %0 : vector<1x32xf32> to vector<8x32xf32>
    %33 = arith.mulf %31, %32 : vector<8x32xf32>
    %34 = vector.broadcast %1 : vector<1x32xf32> to vector<8x32xf32>
    %35 = arith.addf %33, %34 : vector<8x32xf32>
    %36 = arith.truncf %35 : vector<8x32xf32> to vector<8x32xbf16>
    %cst_30 = arith.constant dense<0.000000e+00> : vector<16x32xf32>
    %37 = tpu.matmul %2, %36, %cst_30 {dimension_numbers = #tpu.dot_dimension_numbers<[1], [0], [0], [1], [0, 0, 1, 1], [], []>} : vector<16x8xbf16>, vector<8x32xbf16>, vector<16x32xf32> -> vector<16x32xf32>
    %38 = vector.broadcast %3 : vector<16x1xf32> to vector<16x32xf32>
    %39 = arith.addf %37, %38 : vector<16x32xf32>
    %cst_31 = arith.constant 5.000000e-01 : f32
    %40 = vector.broadcast %cst_31 : f32 to vector<16x32xf32>
    %41 = arith.mulf %40, %39 : vector<16x32xf32>
    %cst_32 = arith.constant 0.707106769 : f32
    %42 = vector.broadcast %cst_32 : f32 to vector<16x32xf32>
    %43 = arith.mulf %39, %42 : vector<16x32xf32>
    %44 = math.erf %43 : vector<16x32xf32>
    %cst_33 = arith.constant 1.000000e+00 : f32
    %45 = vector.broadcast %cst_33 : f32 to vector<16x32xf32>
    %46 = arith.addf %45, %44 : vector<16x32xf32>
    %47 = arith.mulf %41, %46 : vector<16x32xf32>
    %48 = arith.truncf %47 : vector<16x32xf32> to vector<16x32xbf16>
    %cst_34 = arith.constant dense<0.000000e+00> : vector<8x32xf32>
    %49 = tpu.matmul %4, %48, %cst_34 {dimension_numbers = #tpu.dot_dimension_numbers<[1], [0], [0], [1], [0, 0, 1, 1], [], []>} : vector<8x16xbf16>, vector<16x32xbf16>, vector<8x32xf32> -> vector<8x32xf32>
    %50 = vector.broadcast %5 : vector<8x1xf32> to vector<8x32xf32>
    %51 = arith.addf %49, %50 : vector<8x32xf32>
    %52 = arith.addf %13, %51 : vector<8x32xf32>
    %cst_35 = arith.constant dense<0.000000e+00> : vector<8xf32>
    %53 = vector.multi_reduction <add>, %52, %cst_35 [1] : vector<8x32xf32> to vector<8xf32>
    %54 = vector.shape_cast %53 : vector<8xf32> to vector<8x1xf32>
    %cst_36 = arith.constant 3.200000e+01 : f32
    %55 = vector.broadcast %cst_36 : f32 to vector<8x1xf32>
    %56 = arith.divf %54, %55 : vector<8x1xf32>
    %57 = vector.broadcast %56 : vector<8x1xf32> to vector<8x32xf32>
    %58 = arith.subf %52, %57 : vector<8x32xf32>
    %59 = arith.mulf %58, %58 : vector<8x32xf32>
    %cst_37 = arith.constant dense<0.000000e+00> : vector<8xf32>
    %60 = vector.multi_reduction <add>, %59, %cst_37 [1] : vector<8x32xf32> to vector<8xf32>
    %61 = vector.shape_cast %60 : vector<8xf32> to vector<8x1xf32>
    %cst_38 = arith.constant 3.200000e+01 : f32
    %62 = vector.broadcast %cst_38 : f32 to vector<8x1xf32>
    %63 = arith.divf %61, %62 : vector<8x1xf32>
    %64 = vector.broadcast %56 : vector<8x1xf32> to vector<8x32xf32>
    %65 = arith.subf %52, %64 : vector<8x32xf32>
    %cst_39 = arith.constant 9.99999974E-6 : f32
    %66 = vector.broadcast %cst_39 : f32 to vector<8x1xf32>
    %67 = arith.addf %63, %66 : vector<8x1xf32>
    %68 = math.rsqrt %67 : vector<8x1xf32>
    %69 = vector.broadcast %68 : vector<8x1xf32> to vector<8x32xf32>
    %70 = arith.mulf %65, %69 : vector<8x32xf32>
    %71 = vector.broadcast %6 : vector<1x32xf32> to vector<8x32xf32>
    %72 = arith.mulf %70, %71 : vector<8x32xf32>
    %73 = vector.broadcast %7 : vector<1x32xf32> to vector<8x32xf32>
    %74 = arith.addf %72, %73 : vector<8x32xf32>
    %75 = arith.truncf %74 : vector<8x32xf32> to vector<8x32xbf16>
    %cst_40 = arith.constant dense<0.000000e+00> : vector<8x64xf32>
    %76 = tpu.matmul %75, %8, %cst_40 {dimension_numbers = #tpu.dot_dimension_numbers<[1], [0], [0], [1], [0, 0, 1, 1], [], []>} : vector<8x32xbf16>, vector<32x64xbf16>, vector<8x64xf32> -> vector<8x64xf32>
    %77 = vector.broadcast %9 : vector<1x64xf32> to vector<8x64xf32>
    %78 = arith.addf %76, %77 : vector<8x64xf32>
    %cst_41 = arith.constant 5.000000e-01 : f32
    %79 = vector.broadcast %cst_41 : f32 to vector<8x64xf32>
    %80 = arith.mulf %79, %78 : vector<8x64xf32>
    %cst_42 = arith.constant 0.707106769 : f32
    %81 = vector.broadcast %cst_42 : f32 to vector<8x64xf32>
    %82 = arith.mulf %78, %81 : vector<8x64xf32>
    %83 = math.erf %82 : vector<8x64xf32>
    %cst_43 = arith.constant 1.000000e+00 : f32
    %84 = vector.broadcast %cst_43 : f32 to vector<8x64xf32>
    %85 = arith.addf %84, %83 : vector<8x64xf32>
    %86 = arith.mulf %80, %85 : vector<8x64xf32>
    %87 = arith.truncf %86 : vector<8x64xf32> to vector<8x64xbf16>
    %cst_44 = arith.constant dense<0.000000e+00> : vector<8x32xf32>
    %88 = tpu.matmul %87, %10, %cst_44 {dimension_numbers = #tpu.dot_dimension_numbers<[1], [0], [0], [1], [0, 0, 1, 1], [], []>} : vector<8x64xbf16>, vector<64x32xbf16>, vector<8x32xf32> -> vector<8x32xf32>
    %89 = vector.broadcast %11 : vector<1x32xf32> to vector<8x32xf32>
    %90 = arith.addf %88, %89 : vector<8x32xf32>
    %91 = arith.addf %52, %90 : vector<8x32xf32>
    %c0_45 = arith.constant 0 : index
    %c0_46 = arith.constant 0 : index
    %c0_47 = arith.constant 0 : index
    %92 = vector.load %arg14[%c0_45, %c0_46, %c0_47] : memref<2x8x32xf32, #tpu.memory_space<vmem>>, vector<1x8x32xf32>
    %93 = vector.shape_cast %92 : vector<1x8x32xf32> to vector<8x32xf32>
    %94 = vector.shape_cast %91 : vector<8x32xf32> to vector<1x8x32xf32>
    tpu.vector_store %arg14[%c0_45, %c0_46, %c0_47], %94 {strides = array<i32>} : memref<2x8x32xf32, #tpu.memory_space<vmem>>, vector<1x8x32xf32>,
    %c1 = arith.constant 1 : index
    %c0_48 = arith.constant 0 : index
    %c0_49 = arith.constant 0 : index
    %95 = vector.load %arg1[%c1, %c0_48, %c0_49] : memref<2x8x32xf32, #tpu.memory_space<vmem>>, vector<1x8x32xf32>
    %96 = vector.shape_cast %95 : vector<1x8x32xf32> to vector<8x32xf32>
    %cst_50 = arith.constant dense<0.000000e+00> : vector<8xf32>
    %97 = vector.multi_reduction <add>, %96, %cst_50 [1] : vector<8x32xf32> to vector<8xf32>
    %98 = vector.shape_cast %97 : vector<8xf32> to vector<8x1xf32>
    %cst_51 = arith.constant 3.200000e+01 : f32
    %99 = vector.broadcast %cst_51 : f32 to vector<8x1xf32>
    %100 = arith.divf %98, %99 : vector<8x1xf32>
    %101 = vector.broadcast %100 : vector<8x1xf32> to vector<8x32xf32>
    %102 = arith.subf %96, %101 : vector<8x32xf32>
    %103 = arith.mulf %102, %102 : vector<8x32xf32>
    %cst_52 = arith.constant dense<0.000000e+00> : vector<8xf32>
    %104 = vector.multi_reduction <add>, %103, %cst_52 [1] : vector<8x32xf32> to vector<8xf32>
    %105 = vector.shape_cast %104 : vector<8xf32> to vector<8x1xf32>
    %cst_53 = arith.constant 3.200000e+01 : f32
    %106 = vector.broadcast %cst_53 : f32 to vector<8x1xf32>
    %107 = arith.divf %105, %106 : vector<8x1xf32>
    %108 = vector.broadcast %100 : vector<8x1xf32> to vector<8x32xf32>
    %109 = arith.subf %96, %108 : vector<8x32xf32>
    %cst_54 = arith.constant 9.99999974E-6 : f32
    %110 = vector.broadcast %cst_54 : f32 to vector<8x1xf32>
    %111 = arith.addf %107, %110 : vector<8x1xf32>
    %112 = math.rsqrt %111 : vector<8x1xf32>
    %113 = vector.broadcast %112 : vector<8x1xf32> to vector<8x32xf32>
    %114 = arith.mulf %109, %113 : vector<8x32xf32>
    %115 = vector.broadcast %0 : vector<1x32xf32> to vector<8x32xf32>
    %116 = arith.mulf %114, %115 : vector<8x32xf32>
    %117 = vector.broadcast %1 : vector<1x32xf32> to vector<8x32xf32>
    %118 = arith.addf %116, %117 : vector<8x32xf32>
    %119 = arith.truncf %118 : vector<8x32xf32> to vector<8x32xbf16>
    %cst_55 = arith.constant dense<0.000000e+00> : vector<16x32xf32>
    %120 = tpu.matmul %2, %119, %cst_55 {dimension_numbers = #tpu.dot_dimension_numbers<[1], [0], [0], [1], [0, 0, 1, 1], [], []>} : vector<16x8xbf16>, vector<8x32xbf16>, vector<16x32xf32> -> vector<16x32xf32>
    %121 = vector.broadcast %3 : vector<16x1xf32> to vector<16x32xf32>
    %122 = arith.addf %120, %121 : vector<16x32xf32>
    %cst_56 = arith.constant 5.000000e-01 : f32
    %123 = vector.broadcast %cst_56 : f32 to vector<16x32xf32>
    %124 = arith.mulf %123, %122 : vector<16x32xf32>
    %cst_57 = arith.constant 0.707106769 : f32
    %125 = vector.broadcast %cst_57 : f32 to vector<16x32xf32>
    %126 = arith.mulf %122, %125 : vector<16x32xf32>
    %127 = math.erf %126 : vector<16x32xf32>
    %cst_58 = arith.constant 1.000000e+00 : f32
    %128 = vector.broadcast %cst_58 : f32 to vector<16x32xf32>
    %129 = arith.addf %128, %127 : vector<16x32xf32>
    %130 = arith.mulf %124, %129 : vector<16x32xf32>
    %131 = arith.truncf %130 : vector<16x32xf32> to vector<16x32xbf16>
    %cst_59 = arith.constant dense<0.000000e+00> : vector<8x32xf32>
    %132 = tpu.matmul %4, %131, %cst_59 {dimension_numbers = #tpu.dot_dimension_numbers<[1], [0], [0], [1], [0, 0, 1, 1], [], []>} : vector<8x16xbf16>, vector<16x32xbf16>, vector<8x32xf32> -> vector<8x32xf32>
    %133 = vector.broadcast %5 : vector<8x1xf32> to vector<8x32xf32>
    %134 = arith.addf %132, %133 : vector<8x32xf32>
    %135 = arith.addf %96, %134 : vector<8x32xf32>
    %cst_60 = arith.constant dense<0.000000e+00> : vector<8xf32>
    %136 = vector.multi_reduction <add>, %135, %cst_60 [1] : vector<8x32xf32> to vector<8xf32>
    %137 = vector.shape_cast %136 : vector<8xf32> to vector<8x1xf32>
    %cst_61 = arith.constant 3.200000e+01 : f32
    %138 = vector.broadcast %cst_61 : f32 to vector<8x1xf32>
    %139 = arith.divf %137, %138 : vector<8x1xf32>
    %140 = vector.broadcast %139 : vector<8x1xf32> to vector<8x32xf32>
    %141 = arith.subf %135, %140 : vector<8x32xf32>
    %142 = arith.mulf %141, %141 : vector<8x32xf32>
    %cst_62 = arith.constant dense<0.000000e+00> : vector<8xf32>
    %143 = vector.multi_reduction <add>, %142, %cst_62 [1] : vector<8x32xf32> to vector<8xf32>
    %144 = vector.shape_cast %143 : vector<8xf32> to vector<8x1xf32>
    %cst_63 = arith.constant 3.200000e+01 : f32
    %145 = vector.broadcast %cst_63 : f32 to vector<8x1xf32>
    %146 = arith.divf %144, %145 : vector<8x1xf32>
    %147 = vector.broadcast %139 : vector<8x1xf32> to vector<8x32xf32>
    %148 = arith.subf %135, %147 : vector<8x32xf32>
    %cst_64 = arith.constant 9.99999974E-6 : f32
    %149 = vector.broadcast %cst_64 : f32 to vector<8x1xf32>
    %150 = arith.addf %146, %149 : vector<8x1xf32>
    %151 = math.rsqrt %150 : vector<8x1xf32>
    %152 = vector.broadcast %151 : vector<8x1xf32> to vector<8x32xf32>
    %153 = arith.mulf %148, %152 : vector<8x32xf32>
    %154 = vector.broadcast %6 : vector<1x32xf32> to vector<8x32xf32>
    %155 = arith.mulf %153, %154 : vector<8x32xf32>
    %156 = vector.broadcast %7 : vector<1x32xf32> to vector<8x32xf32>
    %157 = arith.addf %155, %156 : vector<8x32xf32>
    %158 = arith.truncf %157 : vector<8x32xf32> to vector<8x32xbf16>
    %cst_65 = arith.constant dense<0.000000e+00> : vector<8x64xf32>
    %159 = tpu.matmul %158, %8, %cst_65 {dimension_numbers = #tpu.dot_dimension_numbers<[1], [0], [0], [1], [0, 0, 1, 1], [], []>} : vector<8x32xbf16>, vector<32x64xbf16>, vector<8x64xf32> -> vector<8x64xf32>
    %160 = vector.broadcast %9 : vector<1x64xf32> to vector<8x64xf32>
    %161 = arith.addf %159, %160 : vector<8x64xf32>
    %cst_66 = arith.constant 5.000000e-01 : f32
    %162 = vector.broadcast %cst_66 : f32 to vector<8x64xf32>
    %163 = arith.mulf %162, %161 : vector<8x64xf32>
    %cst_67 = arith.constant 0.707106769 : f32
    %164 = vector.broadcast %cst_67 : f32 to vector<8x64xf32>
    %165 = arith.mulf %161, %164 : vector<8x64xf32>
    %166 = math.erf %165 : vector<8x64xf32>
    %cst_68 = arith.constant 1.000000e+00 : f32
    %167 = vector.broadcast %cst_68 : f32 to vector<8x64xf32>
    %168 = arith.addf %167, %166 : vector<8x64xf32>
    %169 = arith.mulf %163, %168 : vector<8x64xf32>
    %170 = arith.truncf %169 : vector<8x64xf32> to vector<8x64xbf16>
    %cst_69 = arith.constant dense<0.000000e+00> : vector<8x32xf32>
    %171 = tpu.matmul %170, %10, %cst_69 {dimension_numbers = #tpu.dot_dimension_numbers<[1], [0], [0], [1], [0, 0, 1, 1], [], []>} : vector<8x64xbf16>, vector<64x32xbf16>, vector<8x32xf32> -> vector<8x32xf32>
    %172 = vector.broadcast %11 : vector<1x32xf32> to vector<8x32xf32>
    %173 = arith.addf %171, %172 : vector<8x32xf32>
    %174 = arith.addf %135, %173 : vector<8x32xf32>
    %c1_70 = arith.constant 1 : index
    %c0_71 = arith.constant 0 : index
    %c0_72 = arith.constant 0 : index
    %175 = vector.load %arg14[%c1_70, %c0_71, %c0_72] : memref<2x8x32xf32, #tpu.memory_space<vmem>>, vector<1x8x32xf32>
    %176 = vector.shape_cast %175 : vector<1x8x32xf32> to vector<8x32xf32>
    %177 = vector.shape_cast %174 : vector<8x32xf32> to vector<1x8x32xf32>
    tpu.vector_store %arg14[%c1_70, %c0_71, %c0_72], %177 {strides = array<i32>} : memref<2x8x32xf32, #tpu.memory_space<vmem>>, vector<1x8x32xf32>,
    return
  }
  func.func @transform_0(%arg0: i32) -> (i32, i32, i32) {
    %c0_i32 = arith.constant 0 : i32
    %c0_i32_0 = arith.constant 0 : i32
    %c0_i32_1 = arith.constant 0 : i32
    return %arg0, %c0_i32, %c0_i32_0 : i32, i32, i32
  }
  func.func @transform_1(%arg0: i32) -> (i32, i32) {
    %c0_i32 = arith.constant 0 : i32
    %c0_i32_0 = arith.constant 0 : i32
    %c0_i32_1 = arith.constant 0 : i32
    return %c0_i32, %c0_i32_0 : i32, i32
  }
  func.func @transform_2(%arg0: i32) -> (i32, i32) {
    %c0_i32 = arith.constant 0 : i32
    %c0_i32_0 = arith.constant 0 : i32
    %c0_i32_1 = arith.constant 0 : i32
    return %c0_i32, %c0_i32_0 : i32, i32
  }
  func.func @transform_3(%arg0: i32) -> (i32, i32) {
    %c0_i32 = arith.constant 0 : i32
    %c0_i32_0 = arith.constant 0 : i32
    %c0_i32_1 = arith.constant 0 : i32
    return %c0_i32, %c0_i32_0 : i32, i32
  }
  func.func @transform_4(%arg0: i32) -> (i32, i32) {
    %c0_i32 = arith.constant 0 : i32
    %c0_i32_0 = arith.constant 0 : i32
    %c0_i32_1 = arith.constant 0 : i32
    return %c0_i32, %c0_i32_0 : i32, i32
  }
  func.func @transform_5(%arg0: i32) -> (i32, i32) {
    %c0_i32 = arith.constant 0 : i32
    %c0_i32_0 = arith.constant 0 : i32
    %c0_i32_1 = arith.constant 0 : i32
    return %c0_i32, %c0_i32_0 : i32, i32
  }
  func.func @transform_6(%arg0: i32) -> (i32, i32) {
    %c0_i32 = arith.constant 0 : i32
    %c0_i32_0 = arith.constant 0 : i32
    %c0_i32_1 = arith.constant 0 : i32
    return %c0_i32, %c0_i32_0 : i32, i32
  }
  func.func @transform_7(%arg0: i32) -> (i32, i32) {
    %c0_i32 = arith.constant 0 : i32
    %c0_i32_0 = arith.constant 0 : i32
    %c0_i32_1 = arith.constant 0 : i32
    return %c0_i32, %c0_i32_0 : i32, i32
  }
  func.func @transform_8(%arg0: i32) -> (i32, i32) {
    %c0_i32 = arith.constant 0 : i32
    %c0_i32_0 = arith.constant 0 : i32
    %c0_i32_1 = arith.constant 0 : i32
    return %c0_i32, %c0_i32_0 : i32, i32
  }
  func.func @transform_9(%arg0: i32) -> (i32, i32) {
    %c0_i32 = arith.constant 0 : i32
    %c0_i32_0 = arith.constant 0 : i32
    %c0_i32_1 = arith.constant 0 : i32
    return %c0_i32, %c0_i32_0 : i32, i32
  }
  func.func @transform_10(%arg0: i32) -> (i32, i32) {
    %c0_i32 = arith.constant 0 : i32
    %c0_i32_0 = arith.constant 0 : i32
    %c0_i32_1 = arith.constant 0 : i32
    return %c0_i32, %c0_i32_0 : i32, i32
  }
  func.func @transform_11(%arg0: i32) -> (i32, i32) {
    %c0_i32 = arith.constant 0 : i32
    %c0_i32_0 = arith.constant 0 : i32
    %c0_i32_1 = arith.constant 0 : i32
    return %c0_i32, %c0_i32_0 : i32, i32
  }
  func.func @transform_12(%arg0: i32) -> (i32, i32) {
    %c0_i32 = arith.constant 0 : i32
    %c0_i32_0 = arith.constant 0 : i32
    %c0_i32_1 = arith.constant 0 : i32
    return %c0_i32, %c0_i32_0 : i32, i32
  }
  func.func @transform_13(%arg0: i32) -> (i32, i32, i32) {
    %c0_i32 = arith.constant 0 : i32
    %c0_i32_0 = arith.constant 0 : i32
    %c0_i32_1 = arith.constant 0 : i32
    return %arg0, %c0_i32, %c0_i32_0 : i32, i32, i32
  }
}

</mosaic_0001>

<llo_original>
// kernel: tpu_custom_call.1
$region0: #{tpu_custom_call.1}
  #allocation0 [shape = 'u32[]', space=smem, size = 0x4, offset = 0x4, fixed_abs, tag = 'smem constant byte address 0x4 - core index']
  #allocation1 [shape = 'u32[72,128]{1,0:T(1,128)}', space=vmem, size = 0x9000, scoped, tag = 'internal scratch']
  %s0 = inlined_call_operand.vmem [shape: f32[2,8,32], index: 0, kind: input, shape index: {}]
  %s1 = inlined_call_operand.vmem [shape: f32[1,32], index: 1, kind: input, shape index: {}]
  %s2 = inlined_call_operand.vmem [shape: f32[1,32], index: 2, kind: input, shape index: {}]
  %s3 = inlined_call_operand.vmem [shape: bf16[16,8], index: 3, kind: input, shape index: {}]
  %s4 = inlined_call_operand.vmem [shape: f32[16,1], index: 4, kind: input, shape index: {}]
  %s5 = inlined_call_operand.vmem [shape: bf16[8,16], index: 5, kind: input, shape index: {}]
  %s6 = inlined_call_operand.vmem [shape: f32[8,1], index: 6, kind: input, shape index: {}]
  %s7 = inlined_call_operand.vmem [shape: f32[1,32], index: 7, kind: input, shape index: {}]
  %s8 = inlined_call_operand.vmem [shape: f32[1,32], index: 8, kind: input, shape index: {}]
  %s9 = inlined_call_operand.vmem [shape: bf16[32,64], index: 9, kind: input, shape index: {}]
  %s10 = inlined_call_operand.vmem [shape: f32[1,64], index: 10, kind: input, shape index: {}]
  %s11 = inlined_call_operand.vmem [shape: bf16[64,32], index: 11, kind: input, shape index: {}]
  %s12 = inlined_call_operand.vmem [shape: f32[1,32], index: 12, kind: input, shape index: {}]
  %s13 = inlined_call_operand.hbm [shape: f32[2,8,32], index: 13, kind: output, shape index: {}]
  %s14 = sld [smem:[#allocation0]]
  $region62: #{tpu_custom_call.1} parent=0
    _
  %s16 = ssub.s32 1, %s14
  %s17 = scalar_select 0, %s16, %s14
  $region1: #{tpu_custom_call.1} parent=0
    #allocation2 [shape = 'u8[8192]{0}', space=vmem, size = 0x2000, scoped, tag = 'output window, operand 0, single buffered']
    #allocation3 [shape = 's32[1]{0}', space=sflag, size = 0x4, scoped, tag = 'scoped memory for tpu_custom_call.1']
    %18 = vsyncpa [#allocation3], 0
    // Predicated region
    $region2: #{tpu_custom_call.1} parent=1 // pred_check
      _
    $region3: #{tpu_custom_call.1} parent=1 // pred_check_branch
      %20 = sbr.rel (0) target = $region5
    $region4: #{tpu_custom_call.1} parent=1 // pred_region
      _
    $region5: #{tpu_custom_call.1} parent=1 // pred_fallthru
      _
    // Predicated region
    $region6: #{tpu_custom_call.1} parent=1 // pred_check
      _
    $region7: #{tpu_custom_call.1} parent=1 // pred_check_branch
      %22 = sbr.rel (0) target = $region9
    $region8: #{tpu_custom_call.1} parent=1 // pred_region
      _
    $region9: #{tpu_custom_call.1} parent=1 // pred_fallthru
      _
    // Predicated region
    $region10: #{tpu_custom_call.1} parent=1 // pred_check
      _
    $region11: #{tpu_custom_call.1} parent=1 // pred_check_branch
      %24 = sbr.rel (0) target = $region13
    $region12: #{tpu_custom_call.1} parent=1 // pred_region
      _
    $region13: #{tpu_custom_call.1} parent=1 // pred_fallthru
      _
    // Predicated region
    $region14: #{tpu_custom_call.1} parent=1 // pred_check
      _
    $region15: #{tpu_custom_call.1} parent=1 // pred_check_branch
      %26 = sbr.rel (0) target = $region17
    $region16: #{tpu_custom_call.1} parent=1 // pred_region
      _
    $region17: #{tpu_custom_call.1} parent=1 // pred_fallthru
      _
    // Predicated region
    $region18: #{tpu_custom_call.1} parent=1 // pred_check
      _
    $region19: #{tpu_custom_call.1} parent=1 // pred_check_branch
      %28 = sbr.rel (0) target = $region21
    $region20: #{tpu_custom_call.1} parent=1 // pred_region
      _
    $region21: #{tpu_custom_call.1} parent=1 // pred_fallthru
      _
    // Predicated region
    $region22: #{tpu_custom_call.1} parent=1 // pred_check
      _
    $region23: #{tpu_custom_call.1} parent=1 // pred_check_branch
      %30 = sbr.rel (0) target = $region25
    $region24: #{tpu_custom_call.1} parent=1 // pred_region
      _
    $region25: #{tpu_custom_call.1} parent=1 // pred_fallthru
      _
    // Predicated region
    $region26: #{tpu_custom_call.1} parent=1 // pred_check
      _
    $region27: #{tpu_custom_call.1} parent=1 // pred_check_branch
      %32 = sbr.rel (0) target = $region29
    $region28: #{tpu_custom_call.1} parent=1 // pred_region
      _
    $region29: #{tpu_custom_call.1} parent=1 // pred_fallthru
      _
    // Predicated region
    $region30: #{tpu_custom_call.1} parent=1 // pred_check
      _
    $region31: #{tpu_custom_call.1} parent=1 // pred_check_branch
      %34 = sbr.rel (0) target = $region33
    $region32: #{tpu_custom_call.1} parent=1 // pred_region
      _
    $region33: #{tpu_custom_call.1} parent=1 // pred_fallthru
      _
    // Predicated region
    $region34: #{tpu_custom_call.1} parent=1 // pred_check
      _
    $region35: #{tpu_custom_call.1} parent=1 // pred_check_branch
      %36 = sbr.rel (0) target = $region37
    $region36: #{tpu_custom_call.1} parent=1 // pred_region
      _
    $region37: #{tpu_custom_call.1} parent=1 // pred_fallthru
      _
    // Predicated region
    $region38: #{tpu_custom_call.1} parent=1 // pred_check
      _
    $region39: #{tpu_custom_call.1} parent=1 // pred_check_branch
      %38 = sbr.rel (0) target = $region41
    $region40: #{tpu_custom_call.1} parent=1 // pred_region
      _
    $region41: #{tpu_custom_call.1} parent=1 // pred_fallthru
      _
    // Predicated region
    $region42: #{tpu_custom_call.1} parent=1 // pred_check
      _
    $region43: #{tpu_custom_call.1} parent=1 // pred_check_branch
      %40 = sbr.rel (0) target = $region45
    $region44: #{tpu_custom_call.1} parent=1 // pred_region
      _
    $region45: #{tpu_custom_call.1} parent=1 // pred_fallthru
      _
    // Predicated region
    $region46: #{tpu_custom_call.1} parent=1 // pred_check
      _
    $region47: #{tpu_custom_call.1} parent=1 // pred_check_branch
      %42 = sbr.rel (0) target = $region49
    $region48: #{tpu_custom_call.1} parent=1 // pred_region
      _
    $region49: #{tpu_custom_call.1} parent=1 // pred_fallthru
      _
    // Predicated region
    $region50: #{tpu_custom_call.1} parent=1 // pred_check
      _
    $region51: #{tpu_custom_call.1} parent=1 // pred_check_branch
      %44 = sbr.rel (0) target = $region53
    $region52: #{tpu_custom_call.1} parent=1 // pred_region
      _
    $region53: #{tpu_custom_call.1} parent=1 // pred_fallthru
      _
    %v46 = vld [vmem:[%s1] sm:$0x1]
    %v47 = vld [vmem:[%s2] sm:$0x1]
    %v48 = vld [vmem:[%s3] sm:$0xf]
    %v49 = vld [vmem:[%s3 + $0x4] sm:$0xf]
    %v50 = vld [vmem:[%s4] sm:$0xff]
    %v51 = vld [vmem:[%s4 + $0x8] sm:$0xff]
    %v52 = vld [vmem:[%s5] sm:$0xf]
    %v53 = vld [vmem:[%s6] sm:$0xff]
    %v54 = vld [vmem:[%s7] sm:$0x1]
    %v55 = vld [vmem:[%s8] sm:$0x1]
    %v56 = vld [vmem:[%s9] sm:$0xf]
    %v57 = vld [vmem:[%s9 + $0x4] sm:$0xf]
    %v58 = vld [vmem:[%s9 + $0x8] sm:$0xf]
    %v59 = vld [vmem:[%s9 + $0xc] sm:$0xf]
    %v60 = vld [vmem:[%s10] sm:$0x1]
    %v61 = vld [vmem:[%s11] sm:$0xf]
    %v62 = vld [vmem:[%s11 + $0x4] sm:$0xf]
    %v63 = vld [vmem:[%s11 + $0x8] sm:$0xf]
    %v64 = vld [vmem:[%s11 + $0xc] sm:$0xf]
    %v65 = vld [vmem:[%s11 + $0x10] sm:$0xf]
    %v66 = vld [vmem:[%s11 + $0x14] sm:$0xf]
    %v67 = vld [vmem:[%s11 + $0x18] sm:$0xf]
    %v68 = vld [vmem:[%s11 + $0x1c] sm:$0xf]
    %v69 = vld [vmem:[%s12] sm:$0x1]
    %v70 = vld [vmem:[%s0] sm:$0xff]
    %vm71 = vcmask 261120
    %v72 = vsel %vm71, %v70, 0.0
    %73 = vadd.xlane.f32.xlu0 %v72
    %v74 = vpop.xlane.xlu0 %73
    %v75 = vrcp.pop 32.0
    %v76 = vmul.f32 32.0, %v75
    %v77 = vsub.f32 1.0, %v76
    %v78 = vmul.f32 %v75, %v77
    %v79 = vadd.f32 %v75, %v78
    %vm80 = vweird.f32 %v75
    %v81 = vsel %vm80, %v75, %v79
    %v82 = vmul.f32 %v74, %v81
    %v83 = vsub.f32 %v70, %v82
    %v84 = vmul.f32 %v83, %v83
    %v85 = vsel %vm71, %v84, 0.0
    %86 = vadd.xlane.f32.xlu0 %v85
    %v87 = vpop.xlane.xlu0 %86
    %v88 = vmul.f32 %v87, %v81
    %v89 = vadd.f32 %v88, 1e-05
    %v90 = vrsqrt.pop %v89
    %v91 = vmul.f32 %v90, %v89
    %v92 = vmul.f32 %v91, %v90
    %v93 = vmul.f32 0.5, %v92
    %v94 = vsub.f32 1.5, %v93
    %v95 = vmul.f32 %v90, %v94
    %vm96 = vweird.f32 %v89
    %vm97 = vweird.f32 %v90
    %vm98 = vmor %vm96, %vm97
    %v99 = vsel %vm98, %v90, %v95
    %v100 = vmul.f32 %v83, %v99
    %v102 = vperm.slane %v46, 0
    %v104 = vmul.f32 %v100, %v102
    %v106 = vperm.slane %v47, 0
    %v108 = vadd.f32 %v104, %v106
    %v109 = vpack.c.bf16 %v108, %v108
    %111 = vset.pattern.permute.xlu0 0
    %112 = vperm.xlu0 %111, %v50
    %v113 = vpop.permute.xlu0 %112
    %116 = vset.pattern.permute.xlu0 0
    %117 = vperm.xlu0 %116, %v51
    %v118 = vpop.permute.xlu0 %117
    %v122 = vunpack.c.l.b16 %v48
    %v123 = vunpack.c.l.b16 %v49
    %v124 = vpack.c.b16 %v123, %v122
    %vm125 = vcmask 64512
    %v127 = vsel %vm125, %v124, 0
    %vm129 = vcmask 1043456
    %v131 = vsel %vm129, %v109, 0
    %133 = vmatpush.bf16.msra.mxu0 0
    %134 = vmatpush.bf16.msra.mxu0 0
    %135 = vmatpush.bf16.msra.mxu0 0
    %136 = vmatpush.bf16.msra.mxu0 0
    %137 = vmatpush.bf16.msra.mxu0 0
    %138 = vmatpush.bf16.msra.mxu0 0
    %139 = vmatpush.bf16.msra.mxu0 0
    %140 = vmatpush.bf16.msra.mxu0 %v131
    %141 = vmatmul.bf16.gmra.mxu0 %v127
    %v142 = vpop.f32.mrf.mxu0
    %v143 = vadd.f32 %v113, %v142
    %v144 = vpop.f32.mrf.mxu0
    %v145 = vadd.f32 %v118, %v144
    %146 = vdwg.mxu0
    %v147 = vmul.f32 %v143, 0.5
    %v148 = vmul.f32 %v145, 0.5
    %v149 = vmul.f32 %v143, 0.70710677
    %v150 = vmul.f32 %v145, 0.70710677
    %v151 = vmul.f32 %v149, %v149
    %v152 = vmin.f32 16.0, %v151
    %v153 = vmul.f32 %v152, 2.1237322e-06
    %v154 = vadd.f32 %v153, 0.00028619796
    %v155 = vmul.f32 %v152, %v154
    %v156 = vadd.f32 %v155, 0.0036580483
    %v157 = vmul.f32 %v152, %v156
    %v158 = vadd.f32 %v157, 0.05243302
    %v159 = vmul.f32 %v152, %v158
    %v160 = vadd.f32 %v159, 0.18741608
    %v161 = vmul.f32 %v152, %v160
    %v162 = vadd.f32 %v161, 1.1283791
    %v163 = vmul.f32 %v149, %v162
    %v164 = vmul.f32 %v152, 3.8918573e-05
    %v165 = vadd.f32 %v164, 0.001143296
    %v166 = vmul.f32 %v152, %v165
    %v167 = vadd.f32 %v166, 0.014752088
    %v168 = vmul.f32 %v152, %v167
    %v169 = vadd.f32 %v168, 0.112945676
    %v170 = vmul.f32 %v152, %v169
    %v171 = vadd.f32 %v170, 0.4994258
    %v172 = vmul.f32 %v152, %v171
    %v173 = vadd.f32 %v172, 1.0
    %v174 = vrcp.pop %v173
    %v175 = vmul.f32 %v173, %v174
    %v176 = vsub.f32 1.0, %v175
    %v177 = vmul.f32 %v174, %v176
    %v178 = vadd.f32 %v174, %v177
    %vm179 = vweird.f32 %v173
    %vm180 = vweird.f32 %v174
    %vm181 = vmor %vm179, %vm180
    %v182 = vsel %vm181, %v174, %v178
    %v183 = vand.u32 2147483647, %v173
    %vm184 = vcmp.eq.f32.partialorder %v183, 8.507059e+37
    %v185 = vand.u32 %v173, 2147483648
    %v186 = vor.u32 1.1754944e-38, %v185
    %v187 = vsel %vm184, %v186, %v182
    %v188 = vmul.f32 %v163, %v187
    %v189 = vmin.f32 %v188, 1.0
    %v190 = vmax.f32 %v189, -1.0
    %v191 = vmul.f32 %v150, %v150
    %v192 = vmin.f32 16.0, %v191
    %v193 = vmul.f32 %v192, 2.1237322e-06
    %v194 = vadd.f32 %v193, 0.00028619796
    %v195 = vmul.f32 %v192, %v194
    %v196 = vadd.f32 %v195, 0.0036580483
    %v197 = vmul.f32 %v192, %v196
    %v198 = vadd.f32 %v197, 0.05243302
    %v199 = vmul.f32 %v192, %v198
    %v200 = vadd.f32 %v199, 0.18741608
    %v201 = vmul.f32 %v192, %v200
    %v202 = vadd.f32 %v201, 1.1283791
    %v203 = vmul.f32 %v150, %v202
    %v204 = vmul.f32 %v192, 3.8918573e-05
    %v205 = vadd.f32 %v204, 0.001143296
    %v206 = vmul.f32 %v192, %v205
    %v207 = vadd.f32 %v206, 0.014752088
    %v208 = vmul.f32 %v192, %v207
    %v209 = vadd.f32 %v208, 0.112945676
    %v210 = vmul.f32 %v192, %v209
    %v211 = vadd.f32 %v210, 0.4994258
    %v212 = vmul.f32 %v192, %v211
    %v213 = vadd.f32 %v212, 1.0
    %v214 = vrcp.pop %v213
    %v215 = vmul.f32 %v213, %v214
    %v216 = vsub.f32 1.0, %v215
    %v217 = vmul.f32 %v214, %v216
    %v218 = vadd.f32 %v214, %v217
    %vm219 = vweird.f32 %v213
    %vm220 = vweird.f32 %v214
    %vm221 = vmor %vm219, %vm220
    %v222 = vsel %vm221, %v214, %v218
    %v223 = vand.u32 2147483647, %v213
    %vm224 = vcmp.eq.f32.partialorder %v223, 8.507059e+37
    %v225 = vand.u32 %v213, 2147483648
    %v226 = vor.u32 1.1754944e-38, %v225
    %v227 = vsel %vm224, %v226, %v222
    %v228 = vmul.f32 %v203, %v227
    %v229 = vmin.f32 %v228, 1.0
    %v230 = vmax.f32 %v229, -1.0
    %v231 = vadd.f32 %v190, 1.0
    %v232 = vadd.f32 %v230, 1.0
    %v233 = vmul.f32 %v147, %v231
    %v234 = vmul.f32 %v148, %v232
    %v235 = vpack.c.bf16 %v234, %v233
    %237 = vset.pattern.permute.xlu0 0
    %238 = vperm.xlu0 %237, %v53
    %v239 = vpop.permute.xlu0 %238
    %vm241 = vcmask 130048
    %v243 = vsel %vm241, %v52, 0
    %245 = vmatpush.bf16.msra.mxu0 0
    %246 = vmatpush.bf16.msra.mxu0 0
    %247 = vmatpush.bf16.msra.mxu0 0
    %248 = vmatpush.bf16.msra.mxu0 0
    %249 = vmatpush.bf16.msra.mxu0 0
    %250 = vmatpush.bf16.msra.mxu0 0
    %251 = vmatpush.bf16.msra.mxu0 0
    %252 = vmatpush.bf16.msra.mxu0 %v235
    %253 = vmatmul.bf16.gmra.mxu0 %v243
    %v254 = vpop.f32.mrf.mxu0
    %v255 = vadd.f32 %v239, %v254
    %v256 = vpop.f32.mrf.mxu0
    %257 = vdwg.mxu0
    %v258 = vadd.f32 %v70, %v255
    %v259 = vsel %vm71, %v258, 0.0
    %260 = vadd.xlane.f32.xlu0 %v259
    %v261 = vpop.xlane.xlu0 %260
    %v262 = vmul.f32 %v261, %v81
    %v263 = vsub.f32 %v258, %v262
    %v264 = vmul.f32 %v263, %v263
    %v265 = vsel %vm71, %v264, 0.0
    %266 = vadd.xlane.f32.xlu0 %v265
    %v267 = vpop.xlane.xlu0 %266
    %v268 = vmul.f32 %v267, %v81
    %v269 = vadd.f32 %v268, 1e-05
    %v270 = vrsqrt.pop %v269
    %v271 = vmul.f32 %v270, %v269
    %v272 = vmul.f32 %v271, %v270
    %v273 = vmul.f32 0.5, %v272
    %v274 = vsub.f32 1.5, %v273
    %v275 = vmul.f32 %v270, %v274
    %vm276 = vweird.f32 %v269
    %vm277 = vweird.f32 %v270
    %vm278 = vmor %vm276, %vm277
    %v279 = vsel %vm278, %v270, %v275
    %v280 = vmul.f32 %v263, %v279
    %v282 = vperm.slane %v54, 0
    %v284 = vmul.f32 %v280, %v282
    %v286 = vperm.slane %v55, 0
    %v288 = vadd.f32 %v284, %v286
    %v289 = vpack.c.bf16 %v288, %v288
    %v291 = vperm.slane %v60, 0
    %v297 = vunpack.c.l.b16 %v56
    %v298 = vunpack.c.l.b16 %v57
    %v299 = vunpack.c.l.b16 %v58
    %v300 = vunpack.c.l.b16 %v59
    %v301 = vpack.c.b16 %v298, %v297
    %v302 = vpack.c.b16 %v300, %v299
    %v306 = vsel %vm71, %v289, 0
    %308 = vmatpush.bf16.msra.mxu0 0
    %309 = vmatpush.bf16.msra.mxu0 0
    %310 = vmatpush.bf16.msra.mxu0 0
    %311 = vmatpush.bf16.msra.mxu0 0
    %312 = vmatpush.bf16.msra.mxu0 0
    %313 = vmatpush.bf16.msra.mxu0 0
    %314 = vmatpush.bf16.msra.mxu0 %v302
    %315 = vmatpush.bf16.msra.mxu0 %v301
    %316 = vmatmul.bf16.gmra.mxu0 %v306
    %v317 = vpop.f32.mrf.mxu0
    %v318 = vadd.f32 %v291, %v317
    %v319 = vpop.f32.mrf.mxu0
    %320 = vdwg.mxu0
    %v321 = vmul.f32 %v318, 0.5
    %v322 = vmul.f32 %v318, 0.70710677
    %v323 = vmul.f32 %v322, %v322
    %v324 = vmin.f32 16.0, %v323
    %v325 = vmul.f32 %v324, 2.1237322e-06
    %v326 = vadd.f32 %v325, 0.00028619796
    %v327 = vmul.f32 %v324, %v326
    %v328 = vadd.f32 %v327, 0.0036580483
    %v329 = vmul.f32 %v324, %v328
    %v330 = vadd.f32 %v329, 0.05243302
    %v331 = vmul.f32 %v324, %v330
    %v332 = vadd.f32 %v331, 0.18741608
    %v333 = vmul.f32 %v324, %v332
    %v334 = vadd.f32 %v333, 1.1283791
    %v335 = vmul.f32 %v322, %v334
    %v336 = vmul.f32 %v324, 3.8918573e-05
    %v337 = vadd.f32 %v336, 0.001143296
    %v338 = vmul.f32 %v324, %v337
    %v339 = vadd.f32 %v338, 0.014752088
    %v340 = vmul.f32 %v324, %v339
    %v341 = vadd.f32 %v340, 0.112945676
    %v342 = vmul.f32 %v324, %v341
    %v343 = vadd.f32 %v342, 0.4994258
    %v344 = vmul.f32 %v324, %v343
    %v345 = vadd.f32 %v344, 1.0
    %v346 = vrcp.pop %v345
    %v347 = vmul.f32 %v345, %v346
    %v348 = vsub.f32 1.0, %v347
    %v349 = vmul.f32 %v346, %v348
    %v350 = vadd.f32 %v346, %v349
    %vm351 = vweird.f32 %v345
    %vm352 = vweird.f32 %v346
    %vm353 = vmor %vm351, %vm352
    %v354 = vsel %vm353, %v346, %v350
    %v355 = vand.u32 2147483647, %v345
    %vm356 = vcmp.eq.f32.partialorder %v355, 8.507059e+37
    %v357 = vand.u32 %v345, 2147483648
    %v358 = vor.u32 1.1754944e-38, %v357
    %v359 = vsel %vm356, %v358, %v354
    %v360 = vmul.f32 %v335, %v359
    %v361 = vmin.f32 %v360, 1.0
    %v362 = vmax.f32 %v361, -1.0
    %v363 = vadd.f32 %v362, 1.0
    %v364 = vmul.f32 %v321, %v363
    %v365 = vpack.c.bf16 %v364, %v364
    %v367 = vperm.slane %v69, 0
    %v377 = vunpack.c.l.b16 %v61
    %v378 = vunpack.c.l.b16 %v62
    %v379 = vunpack.c.l.b16 %v63
    %v380 = vunpack.c.l.b16 %v64
    %v381 = vunpack.c.l.b16 %v65
    %v382 = vunpack.c.l.b16 %v66
    %v383 = vunpack.c.l.b16 %v67
    %v384 = vunpack.c.l.b16 %v68
    %v385 = vpack.c.b16 %v378, %v377
    %v386 = vpack.c.b16 %v380, %v379
    %v387 = vpack.c.b16 %v382, %v381
    %v388 = vpack.c.b16 %v384, %v383
    %vm393 = vcmask 523264
    %v395 = vsel %vm393, %v365, 0
    %397 = vmatpush.bf16.msra.mxu0 0
    %398 = vmatpush.bf16.msra.mxu0 0
    %399 = vmatpush.bf16.msra.mxu0 0
    %400 = vmatpush.bf16.msra.mxu0 0
    %401 = vmatpush.bf16.msra.mxu0 %v388
    %402 = vmatpush.bf16.msra.mxu0 %v387
    %403 = vmatpush.bf16.msra.mxu0 %v386
    %404 = vmatpush.bf16.msra.mxu0 %v385
    %405 = vmatmul.bf16.gmra.mxu0 %v395
    %v406 = vpop.f32.mrf.mxu0
    %v407 = vadd.f32 %v367, %v406
    %v408 = vpop.f32.mrf.mxu0
    %409 = vdwg.mxu0
    %v410 = vadd.f32 %v258, %v407
    %411 = vst.msk [vmem:[#allocation2] sm:$0xff] %vm71, %v410
    %s412 = scalar_lea.vmem %s0, 8
    %v413 = vld [vmem:[%s412] sm:$0xff]
    %v414 = vsel %vm71, %v413, 0.0
    %415 = vadd.xlane.f32.xlu0 %v414
    %v416 = vpop.xlane.xlu0 %415
    %v417 = vmul.f32 %v416, %v81
    %v418 = vsub.f32 %v413, %v417
    %v419 = vmul.f32 %v418, %v418
    %v420 = vsel %vm71, %v419, 0.0
    %421 = vadd.xlane.f32.xlu0 %v420
    %v422 = vpop.xlane.xlu0 %421
    %v423 = vmul.f32 %v422, %v81
    %v424 = vadd.f32 %v423, 1e-05
    %v425 = vrsqrt.pop %v424
    %v426 = vmul.f32 %v425, %v424
    %v427 = vmul.f32 %v426, %v425
    %v428 = vmul.f32 0.5, %v427
    %v429 = vsub.f32 1.5, %v428
    %v430 = vmul.f32 %v425, %v429
    %vm431 = vweird.f32 %v424
    %vm432 = vweird.f32 %v425
    %vm433 = vmor %vm431, %vm432
    %v434 = vsel %vm433, %v425, %v430
    %v435 = vmul.f32 %v418, %v434
    %v436 = vmul.f32 %v435, %v102
    %v437 = vadd.f32 %v436, %v106
    %v438 = vpack.c.bf16 %v437, %v437
    %v440 = vsel %vm129, %v438, 0
    %442 = vmatpush.bf16.msra.mxu0 0
    %443 = vmatpush.bf16.msra.mxu0 0
    %444 = vmatpush.bf16.msra.mxu0 0
    %445 = vmatpush.bf16.msra.mxu0 0
    %446 = vmatpush.bf16.msra.mxu0 0
    %447 = vmatpush.bf16.msra.mxu0 0
    %448 = vmatpush.bf16.msra.mxu0 0
    %449 = vmatpush.bf16.msra.mxu0 %v440
    %450 = vmatmul.bf16.gmra.mxu0 %v127
    %v451 = vpop.f32.mrf.mxu0
    %v452 = vadd.f32 %v113, %v451
    %v453 = vpop.f32.mrf.mxu0
    %v454 = vadd.f32 %v118, %v453
    %455 = vdwg.mxu0
    %v456 = vmul.f32 %v452, 0.5
    %v457 = vmul.f32 %v454, 0.5
    %v458 = vmul.f32 %v452, 0.70710677
    %v459 = vmul.f32 %v454, 0.70710677
    %v460 = vmul.f32 %v458, %v458
    %v461 = vmin.f32 16.0, %v460
    %v462 = vmul.f32 %v461, 2.1237322e-06
    %v463 = vadd.f32 %v462, 0.00028619796
    %v464 = vmul.f32 %v461, %v463
    %v465 = vadd.f32 %v464, 0.0036580483
    %v466 = vmul.f32 %v461, %v465
    %v467 = vadd.f32 %v466, 0.05243302
    %v468 = vmul.f32 %v461, %v467
    %v469 = vadd.f32 %v468, 0.18741608
    %v470 = vmul.f32 %v461, %v469
    %v471 = vadd.f32 %v470, 1.1283791
    %v472 = vmul.f32 %v458, %v471
    %v473 = vmul.f32 %v461, 3.8918573e-05
    %v474 = vadd.f32 %v473, 0.001143296
    %v475 = vmul.f32 %v461, %v474
    %v476 = vadd.f32 %v475, 0.014752088
    %v477 = vmul.f32 %v461, %v476
    %v478 = vadd.f32 %v477, 0.112945676
    %v479 = vmul.f32 %v461, %v478
    %v480 = vadd.f32 %v479, 0.4994258
    %v481 = vmul.f32 %v461, %v480
    %v482 = vadd.f32 %v481, 1.0
    %v483 = vrcp.pop %v482
    %v484 = vmul.f32 %v482, %v483
    %v485 = vsub.f32 1.0, %v484
    %v486 = vmul.f32 %v483, %v485
    %v487 = vadd.f32 %v483, %v486
    %vm488 = vweird.f32 %v482
    %vm489 = vweird.f32 %v483
    %vm490 = vmor %vm488, %vm489
    %v491 = vsel %vm490, %v483, %v487
    %v492 = vand.u32 2147483647, %v482
    %vm493 = vcmp.eq.f32.partialorder %v492, 8.507059e+37
    %v494 = vand.u32 %v482, 2147483648
    %v495 = vor.u32 1.1754944e-38, %v494
    %v496 = vsel %vm493, %v495, %v491
    %v497 = vmul.f32 %v472, %v496
    %v498 = vmin.f32 %v497, 1.0
    %v499 = vmax.f32 %v498, -1.0
    %v500 = vmul.f32 %v459, %v459
    %v501 = vmin.f32 16.0, %v500
    %v502 = vmul.f32 %v501, 2.1237322e-06
    %v503 = vadd.f32 %v502, 0.00028619796
    %v504 = vmul.f32 %v501, %v503
    %v505 = vadd.f32 %v504, 0.0036580483
    %v506 = vmul.f32 %v501, %v505
    %v507 = vadd.f32 %v506, 0.05243302
    %v508 = vmul.f32 %v501, %v507
    %v509 = vadd.f32 %v508, 0.18741608
    %v510 = vmul.f32 %v501, %v509
    %v511 = vadd.f32 %v510, 1.1283791
    %v512 = vmul.f32 %v459, %v511
    %v513 = vmul.f32 %v501, 3.8918573e-05
    %v514 = vadd.f32 %v513, 0.001143296
    %v515 = vmul.f32 %v501, %v514
    %v516 = vadd.f32 %v515, 0.014752088
    %v517 = vmul.f32 %v501, %v516
    %v518 = vadd.f32 %v517, 0.112945676
    %v519 = vmul.f32 %v501, %v518
    %v520 = vadd.f32 %v519, 0.4994258
    %v521 = vmul.f32 %v501, %v520
    %v522 = vadd.f32 %v521, 1.0
    %v523 = vrcp.pop %v522
    %v524 = vmul.f32 %v522, %v523
    %v525 = vsub.f32 1.0, %v524
    %v526 = vmul.f32 %v523, %v525
    %v527 = vadd.f32 %v523, %v526
    %vm528 = vweird.f32 %v522
    %vm529 = vweird.f32 %v523
    %vm530 = vmor %vm528, %vm529
    %v531 = vsel %vm530, %v523, %v527
    %v532 = vand.u32 2147483647, %v522
    %vm533 = vcmp.eq.f32.partialorder %v532, 8.507059e+37
    %v534 = vand.u32 %v522, 2147483648
    %v535 = vor.u32 1.1754944e-38, %v534
    %v536 = vsel %vm533, %v535, %v531
    %v537 = vmul.f32 %v512, %v536
    %v538 = vmin.f32 %v537, 1.0
    %v539 = vmax.f32 %v538, -1.0
    %v540 = vadd.f32 %v499, 1.0
    %v541 = vadd.f32 %v539, 1.0
    %v542 = vmul.f32 %v456, %v540
    %v543 = vmul.f32 %v457, %v541
    %v544 = vpack.c.bf16 %v543, %v542
    %545 = vmatpush.bf16.msra.mxu0 0
    %546 = vmatpush.bf16.msra.mxu0 0
    %547 = vmatpush.bf16.msra.mxu0 0
    %548 = vmatpush.bf16.msra.mxu0 0
    %549 = vmatpush.bf16.msra.mxu0 0
    %550 = vmatpush.bf16.msra.mxu0 0
    %551 = vmatpush.bf16.msra.mxu0 0
    %552 = vmatpush.bf16.msra.mxu0 %v544
    %553 = vmatmul.bf16.gmra.mxu0 %v243
    %v554 = vpop.f32.mrf.mxu0
    %v555 = vadd.f32 %v239, %v554
    %v556 = vpop.f32.mrf.mxu0
    %557 = vdwg.mxu0
    %v558 = vadd.f32 %v413, %v555
    %v559 = vsel %vm71, %v558, 0.0
    %560 = vadd.xlane.f32.xlu0 %v559
    %v561 = vpop.xlane.xlu0 %560
    %v562 = vmul.f32 %v561, %v81
    %v563 = vsub.f32 %v558, %v562
    %v564 = vmul.f32 %v563, %v563
    %v565 = vsel %vm71, %v564, 0.0
    %566 = vadd.xlane.f32.xlu0 %v565
    %v567 = vpop.xlane.xlu0 %566
    %v568 = vmul.f32 %v567, %v81
    %v569 = vadd.f32 %v568, 1e-05
    %v570 = vrsqrt.pop %v569
    %v571 = vmul.f32 %v570, %v569
    %v572 = vmul.f32 %v571, %v570
    %v573 = vmul.f32 0.5, %v572
    %v574 = vsub.f32 1.5, %v573
    %v575 = vmul.f32 %v570, %v574
    %vm576 = vweird.f32 %v569
    %vm577 = vweird.f32 %v570
    %vm578 = vmor %vm576, %vm577
    %v579 = vsel %vm578, %v570, %v575
    %v580 = vmul.f32 %v563, %v579
    %v581 = vmul.f32 %v580, %v282
    %v582 = vadd.f32 %v581, %v286
    %v583 = vpack.c.bf16 %v582, %v582
    %v585 = vsel %vm71, %v583, 0
    %587 = vmatpush.bf16.msra.mxu0 0
    %588 = vmatpush.bf16.msra.mxu0 0
    %589 = vmatpush.bf16.msra.mxu0 0
    %590 = vmatpush.bf16.msra.mxu0 0
    %591 = vmatpush.bf16.msra.mxu0 0
    %592 = vmatpush.bf16.msra.mxu0 0
    %593 = vmatpush.bf16.msra.mxu0 %v302
    %594 = vmatpush.bf16.msra.mxu0 %v301
    %595 = vmatmul.bf16.gmra.mxu0 %v585
    %v596 = vpop.f32.mrf.mxu0
    %v597 = vadd.f32 %v291, %v596
    %v598 = vpop.f32.mrf.mxu0
    %599 = vdwg.mxu0
    %v600 = vmul.f32 %v597, 0.5
    %v601 = vmul.f32 %v597, 0.70710677
    %v602 = vmul.f32 %v601, %v601
    %v603 = vmin.f32 16.0, %v602
    %v604 = vmul.f32 %v603, 2.1237322e-06
    %v605 = vadd.f32 %v604, 0.00028619796
    %v606 = vmul.f32 %v603, %v605
    %v607 = vadd.f32 %v606, 0.0036580483
    %v608 = vmul.f32 %v603, %v607
    %v609 = vadd.f32 %v608, 0.05243302
    %v610 = vmul.f32 %v603, %v609
    %v611 = vadd.f32 %v610, 0.18741608
    %v612 = vmul.f32 %v603, %v611
    %v613 = vadd.f32 %v612, 1.1283791
    %v614 = vmul.f32 %v601, %v613
    %v615 = vmul.f32 %v603, 3.8918573e-05
    %v616 = vadd.f32 %v615, 0.001143296
    %v617 = vmul.f32 %v603, %v616
    %v618 = vadd.f32 %v617, 0.014752088
    %v619 = vmul.f32 %v603, %v618
    %v620 = vadd.f32 %v619, 0.112945676
    %v621 = vmul.f32 %v603, %v620
    %v622 = vadd.f32 %v621, 0.4994258
    %v623 = vmul.f32 %v603, %v622
    %v624 = vadd.f32 %v623, 1.0
    %v625 = vrcp.pop %v624
    %v626 = vmul.f32 %v624, %v625
    %v627 = vsub.f32 1.0, %v626
    %v628 = vmul.f32 %v625, %v627
    %v629 = vadd.f32 %v625, %v628
    %vm630 = vweird.f32 %v624
    %vm631 = vweird.f32 %v625
    %vm632 = vmor %vm630, %vm631
    %v633 = vsel %vm632, %v625, %v629
    %v634 = vand.u32 2147483647, %v624
    %vm635 = vcmp.eq.f32.partialorder %v634, 8.507059e+37
    %v636 = vand.u32 %v624, 2147483648
    %v637 = vor.u32 1.1754944e-38, %v636
    %v638 = vsel %vm635, %v637, %v633
    %v639 = vmul.f32 %v614, %v638
    %v640 = vmin.f32 %v639, 1.0
    %v641 = vmax.f32 %v640, -1.0
    %v642 = vadd.f32 %v641, 1.0
    %v643 = vmul.f32 %v600, %v642
    %v644 = vpack.c.bf16 %v643, %v643
    %v646 = vsel %vm393, %v644, 0
    %648 = vmatpush.bf16.msra.mxu0 0
    %649 = vmatpush.bf16.msra.mxu0 0
    %650 = vmatpush.bf16.msra.mxu0 0
    %651 = vmatpush.bf16.msra.mxu0 0
    %652 = vmatpush.bf16.msra.mxu0 %v388
    %653 = vmatpush.bf16.msra.mxu0 %v387
    %654 = vmatpush.bf16.msra.mxu0 %v386
    %655 = vmatpush.bf16.msra.mxu0 %v385
    %656 = vmatmul.bf16.gmra.mxu0 %v646
    %v657 = vpop.f32.mrf.mxu0
    %v658 = vadd.f32 %v367, %v657
    %v659 = vpop.f32.mrf.mxu0
    %660 = vdwg.mxu0
    %v661 = vadd.f32 %v558, %v658
    %s662 = scalar_lea.vmem [#allocation2], 8
    %663 = vst.msk [vmem:[%s662] sm:$0xff] %vm71, %v661
    // Predicated region
    $region54: #{tpu_custom_call.1} parent=1 // pred_check
      _
    $region55: #{tpu_custom_call.1} parent=1 // pred_check_branch
      %665 = sbr.rel (0) target = $region57
    $region56: #{tpu_custom_call.1} parent=1 // pred_region
      %667 = vsyncadd [#allocation3], 0
      %s668 = sshll.u32 [#allocation2], 4
      %s669 = int_to_ptr.vmem [resolvable:$true] %s668
      %s670 = sshll.u32 %s13, 4
      %s671 = int_to_ptr.hbm [resolvable:$true] %s670
      %676 = dma.vmem_to_hbm [thread:$0]  %s669, 256, %s671, [#allocation3], 128, 128, 8
    $region57: #{tpu_custom_call.1} parent=1 // pred_fallthru
      _
    // Predicated region
    $region58: #{tpu_custom_call.1} parent=1 // pred_check
      _
    $region59: #{tpu_custom_call.1} parent=1 // pred_check_branch
      %678 = sbr.rel (0) target = $region61
    $region60: #{tpu_custom_call.1} parent=1 // pred_region
      %680 = dma.done [#allocation3], 256
    $region61: #{tpu_custom_call.1} parent=1 // pred_fallthru
      _
    %681 = vsyncpa [#allocation3], 1

</llo_original>
